<compile_context>
chip_gen: v7x
topology: tpu7x:2x2x1
jax: 0.10.0
libtpu: 0.0.40
codegen_flags: <defaults>
</compile_context>

<pallas_src>
import functools

import numpy as np
import jax
import jax.numpy as jnp
from jax.experimental import pallas as pl
from jax.experimental.pallas import tpu as pltpu


# bf16 FC weights: ~2x less HBM traffic on the dominant layers (the biggest
# lever per the perf review).  Set False for exact-f32 weight streaming.
USE_BF16_FC_WEIGHTS = True


def _round_up(x, m):
    return ((x + m - 1) // m) * m


# ------------------ small generic matmul (conv / pool stage) ---------------- #

def _small_matmul_kernel(x_ref, w_ref, b_ref, o_ref, *, relu):
    acc = jnp.dot(x_ref[...], w_ref[...], preferred_element_type=jnp.float32)
    acc = acc + b_ref[...]
    if relu:
        acc = jnp.maximum(acc, 0.0)
    o_ref[...] = acc.astype(o_ref.dtype)


def _pick_tile_m(mp):
    for t in (256, 128, 64, 32, 16, 8):
        if mp % t == 0:
            return t
    return mp


def small_matmul(x, w, b=None, relu=False):
    """relu_opt(x @ w + b) for the tiny conv/pool matmuls (K, N small)."""
    M, K = x.shape
    K2, N = w.shape
    assert K == K2
    if b is None:
        b = jnp.zeros((N,), jnp.float32)
    Mp = _round_up(M, 8)
    Np = _round_up(N, 128)
    tm = _pick_tile_m(Mp)
    tn = 128
    xp = jnp.pad(x, ((0, Mp - M), (0, 0)))
    wp = jnp.pad(w, ((0, 0), (0, Np - N)))
    bp = jnp.pad(b.reshape(1, N), ((0, 0), (0, Np - N)))
    out = pl.pallas_call(
        functools.partial(_small_matmul_kernel, relu=relu),
        out_shape=jax.ShapeDtypeStruct((Mp, Np), jnp.float32),
        grid_spec=pltpu.PrefetchScalarGridSpec(
            num_scalar_prefetch=0,
            grid=(Mp // tm, Np // tn),
            in_specs=[
                pl.BlockSpec((tm, K), lambda i, j: (i, 0)),
                pl.BlockSpec((K, tn), lambda i, j: (0, j)),
                pl.BlockSpec((1, tn), lambda i, j: (0, j)),
            ],
            out_specs=pl.BlockSpec((tm, tn), lambda i, j: (i, j)),
        ),
        compiler_params=pltpu.CompilerParams(
            dimension_semantics=("parallel", "parallel"),
        ),
    )(xp, wp, bp)
    return out[:M, :N]


# ----------------------- FC layers: tiled Pallas matmul ---------------------- #

_FC_TN = 256                          # lane-dense output tile (1.3% N pad @ 14400)
_FC_MAX_SLAB_BYTES = 8 * 1024 * 1024  # per (tk, tn) weight slab (double-buffered)
_FC_VMEM_LIMIT = 48 * 1024 * 1024     # <= v7x 64 MiB physical VMEM, w/ headroom


def _fc_tiles(K, itemsize):
    """Pick (Kt, tk, tn).  tk is a multiple of 16 (not 128) so fc2 gets
    Kp == 14400 exactly; Kt chosen so one weight slab stays under budget
    (Kt == 1 for both layers in the bf16 default)."""
    full_slab = K * _FC_TN * itemsize
    kt = max(1, -(-full_slab // _FC_MAX_SLAB_BYTES))
    tk = _round_up(-(-K // kt), 16)
    return kt, tk, _FC_TN


def prepare_fc_params(w, b, use_bf16=USE_BF16_FC_WEIGHTS):
    """Pre-pad + pre-tile an (in, out) FC weight to (Nt, Kt, tk, tn).

    Done ONCE at init so every grid step's weight block is one contiguous DMA
    (no strided column reads, no per-forward pad copy of the ~415-830 MB fc2
    weight).  Weights stored in bf16 by default; bias stays f32."""
    K, N = w.shape
    dtype = jnp.bfloat16 if use_bf16 else jnp.float32
    itemsize = 2 if use_bf16 else 4
    Kt, tk, tn = _fc_tiles(K, itemsize)
    Kp = Kt * tk
    Np = _round_up(N, tn)
    wp = jnp.pad(w.astype(dtype), ((0, Kp - K), (0, Np - N)))
    w_tiled = wp.reshape(Kt, tk, Np // tn, tn).transpose(2, 0, 1, 3)
    bp = jnp.pad(b.astype(jnp.float32).reshape(1, N), ((0, 0), (0, Np - N)))
    return {"w": w_tiled, "b": bp, "n_out": N, "k_in": K}


def _fc_kernel(x_ref, w_ref, b_ref, o_ref, *, relu):
    k = pl.program_id(2)
    # bf16 x bf16 -> f32 on the MXU (or f32 x f32 when USE_BF16_FC_WEIGHTS=False).
    part = jnp.dot(x_ref[...], w_ref[...], preferred_element_type=jnp.float32)

    # Accumulate directly into the f32 output block (resident across k: its
    # index map is (i, j)); no separate VMEM accumulator scratch.
    @pl.when(k == 0)
    def _():
        o_ref[...] = part

    @pl.when(k != 0)
    def _():
        o_ref[...] = o_ref[...] + part

    @pl.when(k == pl.num_programs(2) - 1)
    def _():
        r = o_ref[...] + b_ref[...]          # bias (f32) only in finalize
        if relu:
            r = jnp.maximum(r, 0.0)
        o_ref[...] = r


def fc_layer(x, fc, relu=False, *, tm=16):
    """relu_opt(x @ W + b) with W pre-tiled as (Nt, Kt, tk, tn)."""
    w_tiled, b_pad = fc["w"], fc["b"]
    Nt, Kt, tk, tn = w_tiled.shape
    M, K = x.shape
    assert K == fc["k_in"]
    Kp, Np = Kt * tk, Nt * tn
    Mp = _round_up(M, tm)                    # tm=16 matches bf16 sublane packing
    xp = jnp.pad(x, ((0, Mp - M), (0, Kp - K)))
    # Activation is tiny (<=1 MB); cast to the weight dtype so the MXU runs a
    # native (bf16, bf16) matmul with f32 accumulation — no huge in-kernel upcast.
    xp = xp.astype(w_tiled.dtype)

    out = pl.pallas_call(
        functools.partial(_fc_kernel, relu=relu),
        out_shape=jax.ShapeDtypeStruct((Mp, Np), jnp.float32),
        grid_spec=pltpu.PrefetchScalarGridSpec(
            num_scalar_prefetch=0,
            grid=(Mp // tm, Nt, Kt),
            in_specs=[
                # Activation tile; with Kt==1 it is K-resident (fetched once).
                pl.BlockSpec((tm, tk), lambda i, j, k: (i, k)),
                # One contiguous (tk, tn) weight slab per (n-tile, k-tile).
                pl.BlockSpec((None, None, tk, tn), lambda i, j, k: (j, k, 0, 0)),
                pl.BlockSpec((1, tn), lambda i, j, k: (0, j)),
            ],
            out_specs=pl.BlockSpec((tm, tn), lambda i, j, k: (i, j)),
        ),
        compiler_params=pltpu.CompilerParams(
            dimension_semantics=("parallel", "parallel", "arbitrary"),
            vmem_limit_bytes=_FC_VMEM_LIMIT,
        ),
    )(xp, w_tiled, b_pad)
    return out[:M, :fc["n_out"]]


# ------------------------- conv = im2col + matmul --------------------------- #

def _im2col(x, ksize=3, stride=2, pad=1):
    # x: (N, C, H, W) -> (N*Ho*Wo, C*k*k), column order (c, kh, kw) to match
    # PyTorch Conv2d weight.reshape(Cout, Cin*k*k).
    N, C, H, W = x.shape
    Ho = (H + 2 * pad - ksize) // stride + 1
    Wo = (W + 2 * pad - ksize) // stride + 1
    xp = jnp.pad(x, ((0, 0), (0, 0), (pad, pad), (pad, pad)))
    taps = []
    for kh in range(ksize):
        for kw in range(ksize):
            taps.append(xp[:, :, kh:kh + stride * Ho:stride,
                           kw:kw + stride * Wo:stride])
    cols = jnp.stack(taps, axis=2)                       # (N, C, k*k, Ho, Wo)
    cols = cols.reshape(N, C * ksize * ksize, Ho, Wo)
    cols = cols.transpose(0, 2, 3, 1).reshape(N * Ho * Wo, C * ksize * ksize)
    return cols, Ho, Wo


def conv2d_relu(x, weight, bias):
    # weight: (Cout, Cin, 3, 3) — PyTorch layout.  stride=2, pad=1, fused ReLU.
    N, C, H, W = x.shape
    Cout = weight.shape[0]
    cols, Ho, Wo = _im2col(x)
    w2d = weight.reshape(Cout, -1).T                     # (Cin*9, Cout)
    y = small_matmul(cols, w2d, bias, relu=True)         # (N*Ho*Wo, Cout)
    return y.reshape(N, Ho, Wo, Cout).transpose(0, 3, 1, 2)


# -------------------- adaptive avg pool as Pallas matmuls ------------------- #

def _adaptive_pool_matrix(in_size, out_size):
    m = np.zeros((in_size, out_size), dtype=np.float32)
    for o in range(out_size):
        start = (o * in_size) // out_size
        end = -((-(o + 1) * in_size) // out_size)        # ceil((o+1)*in/out)
        m[start:end, o] = 1.0 / (end - start)
    return jnp.asarray(m)


def adaptive_avg_pool(x, out_hw=(15, 15)):
    # Exact AdaptiveAvgPool2d semantics (floor/ceil bins), done as two matmuls.
    N, C, H, W = x.shape
    OH, OW = out_hw
    bw = _adaptive_pool_matrix(W, OW)                    # (W, OW)
    bh = _adaptive_pool_matrix(H, OH)                    # (H, OH)
    z = small_matmul(x.reshape(N * C * H, W), bw)        # contract over W
    z = z.reshape(N, C, H, OW).transpose(0, 1, 3, 2).reshape(N * C * OW, H)
    p = small_matmul(z, bh)                              # contract over H
    return p.reshape(N, C, OW, OH).transpose(0, 1, 3, 2)  # (N, C, OH, OW)


# ------------------------------ parameters ---------------------------------- #

def init_params(key):
    ks = jax.random.split(key, 12)

    def conv_w(k, cout, cin):
        return jax.random.normal(k, (cout, cin, 3, 3), jnp.float32) / np.sqrt(cin * 9)

    # fc weights generated as (in, out) == torch weight.T, then pre-tiled once.
    fc1_w = jax.random.normal(ks[8], (8 * 15 * 15, 14400), jnp.float32) / np.sqrt(1800.0)
    fc1_b = jax.random.normal(ks[9], (14400,), jnp.float32) * 0.01
    fc2_w = jax.random.normal(ks[10], (14400, 14400), jnp.float32) / np.sqrt(14400.0)
    fc2_b = jax.random.normal(ks[11], (14400,), jnp.float32) * 0.01

    params = {
        "conv1_w": conv_w(ks[0], 4, 3),
        "conv1_b": jax.random.normal(ks[1], (4,), jnp.float32) * 0.01,
        "conv2_w": conv_w(ks[2], 8, 4),
        "conv2_b": jax.random.normal(ks[3], (8,), jnp.float32) * 0.01,
        "conv3_w": conv_w(ks[4], 8, 8),
        "conv3_b": jax.random.normal(ks[5], (8,), jnp.float32) * 0.01,
        "conv4_w": conv_w(ks[6], 8, 8),
        "conv4_b": jax.random.normal(ks[7], (8,), jnp.float32) * 0.01,
        "fc1": prepare_fc_params(fc1_w, fc1_b),
        "fc2": prepare_fc_params(fc2_w, fc2_b),
    }
    return params


# ------------------------------ forward pass -------------------------------- #

def latent_encoder_forward(params, x):
    # x: (B, F, H, W, C=3), float32
    B, F, H, W, C = x.shape
    # Exact replica of torch's `x.view(B*F, C, H, W)`: a raw row-major
    # reinterpretation (NOT a transpose), identical to .view on contiguous data.
    x = x.reshape(B * F, C, H, W)
    x = conv2d_relu(x, params["conv1_w"], params["conv1_b"])
    x = conv2d_relu(x, params["conv2_w"], params["conv2_b"])
    x = conv2d_relu(x, params["conv3_w"], params["conv3_b"])
    x = conv2d_relu(x, params["conv4_w"], params["conv4_b"])
    x = adaptive_avg_pool(x, (15, 15))                   # (B*F, 8, 15, 15)
    flat = x.reshape(B * F, 8 * 15 * 15)
    r = fc_layer(flat, params["fc1"], relu=True)
    out = fc_layer(r, params["fc2"], relu=False)
    return out.reshape(B, F, 120, 120)


if __name__ == "__main__":
    key = jax.random.PRNGKey(0)
    pkey, xkey = jax.random.split(key)
    params = init_params(pkey)

    B, F, H, W, C = 2, 2, 32, 32, 3
    x = jax.random.normal(xkey, (B, F, H, W, C), jnp.float32)

    out = latent_encoder_forward(params, x)
    out = jax.block_until_ready(out)

    assert out.shape == (B, F, 120, 120), out.shape
    assert bool(jnp.all(jnp.isfinite(out)))
    print("KERNEL_OK")
</pallas_src>

<mosaic_0001>
module attributes {stable_mosaic.version = 11 : i64} {
  func.func @_small_matmul_kernel(%arg0: i32, %arg1: i32, %arg2: memref<256x27xf32, #tpu.memory_space<vmem>>, %arg3: memref<27x128xf32, #tpu.memory_space<vmem>>, %arg4: memref<1x128xf32, #tpu.memory_space<vmem>>, %arg5: memref<256x128xf32, #tpu.memory_space<vmem>>) attributes {dimension_semantics = [#tpu.dimension_semantics<parallel>, #tpu.dimension_semantics<parallel>], iteration_bounds = array<i64: 4, 1>, scalar_prefetch = 0 : i64, scratch_operands = 0 : i64, tpu.core_type = #tpu.core_type<tc>, window_params = [{transform_indices = @transform_0, window_bounds = array<i64: 256, 27>}, {transform_indices = @transform_1, window_bounds = array<i64: 27, 128>}, {transform_indices = @transform_2, window_bounds = array<i64: 1, 128>}, {transform_indices = @transform_3, window_bounds = array<i64: 256, 128>}]} {
    %c0 = arith.constant 0 : index
    %c0_0 = arith.constant 0 : index
    %0 = vector.load %arg2[%c0, %c0_0] : memref<256x27xf32, #tpu.memory_space<vmem>>, vector<256x27xf32>
    %c0_1 = arith.constant 0 : index
    %c0_2 = arith.constant 0 : index
    %1 = vector.load %arg3[%c0_1, %c0_2] : memref<27x128xf32, #tpu.memory_space<vmem>>, vector<27x128xf32>
    %cst = arith.constant dense<0.000000e+00> : vector<256x128xf32>
    %2 = tpu.matmul %0, %1, %cst {dimension_numbers = #tpu.dot_dimension_numbers<[1], [0], [0], [1], [0, 0, 1, 1], [], []>} : vector<256x27xf32>, vector<27x128xf32>, vector<256x128xf32> -> vector<256x128xf32>
    %c0_3 = arith.constant 0 : index
    %c0_4 = arith.constant 0 : index
    %3 = vector.load %arg4[%c0_3, %c0_4] : memref<1x128xf32, #tpu.memory_space<vmem>>, vector<1x128xf32>
    %4 = vector.broadcast %3 : vector<1x128xf32> to vector<256x128xf32>
    %5 = arith.addf %2, %4 : vector<256x128xf32>
    %cst_5 = arith.constant 0.000000e+00 : f32
    %6 = vector.broadcast %cst_5 : f32 to vector<256x128xf32>
    %7 = arith.maximumf %5, %6 : vector<256x128xf32>
    %c0_6 = arith.constant 0 : index
    %c0_7 = arith.constant 0 : index
    %8 = vector.load %arg5[%c0_6, %c0_7] : memref<256x128xf32, #tpu.memory_space<vmem>>, vector<256x128xf32>
    tpu.vector_store %arg5[%c0_6, %c0_7], %7 {strides = array<i32>} : memref<256x128xf32, #tpu.memory_space<vmem>>, vector<256x128xf32>,
    return
  }
  func.func @transform_0(%arg0: i32, %arg1: i32) -> (i32, i32) {
    %c0_i32 = arith.constant 0 : i32
    %c0_i32_0 = arith.constant 0 : i32
    return %arg0, %c0_i32 : i32, i32
  }
  func.func @transform_1(%arg0: i32, %arg1: i32) -> (i32, i32) {
    %c0_i32 = arith.constant 0 : i32
    %c0_i32_0 = arith.constant 0 : i32
    return %c0_i32, %arg1 : i32, i32
  }
  func.func @transform_2(%arg0: i32, %arg1: i32) -> (i32, i32) {
    %c0_i32 = arith.constant 0 : i32
    %c0_i32_0 = arith.constant 0 : i32
    return %c0_i32, %arg1 : i32, i32
  }
  func.func @transform_3(%arg0: i32, %arg1: i32) -> (i32, i32) {
    %c0_i32 = arith.constant 0 : i32
    return %arg0, %arg1 : i32, i32
  }
}

</mosaic_0001>

<llo_original>
// kernel: tpu_custom_call.1
$region0: #{tpu_custom_call.1}
  #allocation0 [shape = 'u32[]', space=smem, size = 0x4, offset = 0x4, fixed_abs, tag = 'smem constant byte address 0x4 - core index']
  #allocation1 [shape = 'u32[144,128]{1,0:T(1,128)}', space=vmem, size = 0x12000, scoped, tag = 'internal scratch']
  %s0 = inlined_call_operand.vmem [shape: f32[1024,27], index: 0, kind: input, shape index: {}]
  %s1 = inlined_call_operand.vmem [shape: f32[27,128], index: 1, kind: input, shape index: {}]
  %s2 = inlined_call_operand.vmem [shape: f32[1,128], index: 2, kind: input, shape index: {}]
  %s3 = inlined_call_operand.hbm [shape: f32[1024,128], index: 3, kind: output, shape index: {}]
  %s4 = sld [smem:[#allocation0]]
  $region45: #{tpu_custom_call.1} parent=0
    _
  %s6 = ssub.s32 1, %s4
  %s7 = scalar_select 0, %s6, %s4
  $region1: #{tpu_custom_call.1} parent=0
    #allocation2 [shape = 'u8[262144]{0}', space=vmem, size = 0x40000, scoped, tag = 'output window, operand 0']
    #allocation3 [shape = 's32[2]{0}', space=sflag, size = 0x8, scoped, tag = 'scoped memory for tpu_custom_call.1']
    %8 = vsyncpa [#allocation3], 0
    %s9 = scalar_lea.sflag [#allocation3], 1
    %10 = vsyncpa %s9, 0
    loop: start=0, step=1, limit=6
    $region2: #{tpu_custom_call.1} parent=1 // loop_pre_header
      _
    $region3: #{tpu_custom_call.1} parent=1 // loop_header
      %s12 = sphi 0, %s16
      %p13 = scmp.ge.s32.totalorder %s12, 6
      %s19 = sphi 0, %s31
      %s20 = sphi 0, %s27
      %s21 = sphi 0, %s19
      %s22 = sphi 0, %s20
      %s23 = sphi 0, %s21
      %s24 = sphi 0, %s22
      %s34 = sphi 0, %s36
      %s37 = sphi 0, %s34
      %s38 = sphi 0, %s37
      %s54 = sphi 0, %s38
      %s60 = sphi 0, %s62
      %s63 = sphi 0, %s60
      %s64 = sphi 0, %s63
      %s80 = sphi 0, %s64
      %s86 = sphi 0, %s88
      %s89 = sphi 0, %s86
      %s90 = sphi 0, %s89
      %s106 = sphi 0, %s90
      %s114 = sphi 0, %s116
      %s117 = sphi 0, %s114
      %s118 = sphi 0, %s117
      %s134 = sphi 0, %s118
    $region4: #{tpu_custom_call.1} parent=1 // loop_header_branch
      %15 = sbr.rel (%p13) target = $region8
    $region5: #{tpu_custom_call.1} parent=1 // loop_body
      %s17 = ssub.s32 %s12, 1
      %s18 = ssub.s32 %s12, 2
      %s25 = sadd.s32 1, %s20
      %p26 = scmp.ge.s32.totalorder %s25, 1
      %s27 = scalar_select %p26, 0, %s25
      %s28 = sadd.s32 1, %s19
      %s29 = scalar_select %p26, %s28, %s19
      %p30 = scmp.ge.s32.totalorder %s29, 4
      %s31 = scalar_select %p30, 0, %s29
      %s32 = ssub.s32 %s19, %s31
      %p33 = scmp.eq.s32.totalorder %s32, 0
      %s35 = sadd.s32 %s34, 1
      %s36 = scalar_select %p33, %s34, %s35
      %p39 = pneg %p33
      %p40 = scmp.eq.s32.totalorder %s12, 3
      %p41 = por %p39, %p40
      %p42 = scmp.ne.s32.totalorder %s34, %s37
      %p43 = scmp.eq.s32.totalorder %s12, 0
      %p44 = por %p42, %p43
      %p45 = scmp.ne.s32.totalorder %s34, %s37
      %p46 = scmp.eq.s32.totalorder %s17, 3
      %p47 = por %p45, %p46
      %p48 = scmp.ne.s32.totalorder %s37, %s38
      %p49 = scmp.eq.s32.totalorder %s17, 0
      %p50 = por %p48, %p49
      %p51 = scmp.ne.s32.totalorder %s37, %s38
      %p52 = scmp.eq.s32.totalorder %s18, 3
      %p53 = por %p51, %p52
      %p55 = scmp.ne.s32.totalorder %s38, %s54
      %p56 = scmp.eq.s32.totalorder %s18, 0
      %p57 = por %p55, %p56
      %s58 = ssub.s32 %s20, %s27
      %p59 = scmp.eq.s32.totalorder %s58, 0
      %s61 = sadd.s32 %s60, 1
      %s62 = scalar_select %p59, %s60, %s61
      %p65 = pneg %p59
      %p66 = scmp.eq.s32.totalorder %s12, 3
      %p67 = por %p65, %p66
      %p68 = scmp.ne.s32.totalorder %s60, %s63
      %p69 = scmp.eq.s32.totalorder %s12, 0
      %p70 = por %p68, %p69
      %p71 = scmp.ne.s32.totalorder %s60, %s63
      %p72 = scmp.eq.s32.totalorder %s17, 3
      %p73 = por %p71, %p72
      %p74 = scmp.ne.s32.totalorder %s63, %s64
      %p75 = scmp.eq.s32.totalorder %s17, 0
      %p76 = por %p74, %p75
      %p77 = scmp.ne.s32.totalorder %s63, %s64
      %p78 = scmp.eq.s32.totalorder %s18, 3
      %p79 = por %p77, %p78
      %p81 = scmp.ne.s32.totalorder %s64, %s80
      %p82 = scmp.eq.s32.totalorder %s18, 0
      %p83 = por %p81, %p82
      %s84 = ssub.s32 %s20, %s27
      %p85 = scmp.eq.s32.totalorder %s84, 0
      %s87 = sadd.s32 %s86, 1
      %s88 = scalar_select %p85, %s86, %s87
      %p91 = pneg %p85
      %p92 = scmp.eq.s32.totalorder %s12, 3
      %p93 = por %p91, %p92
      %p94 = scmp.ne.s32.totalorder %s86, %s89
      %p95 = scmp.eq.s32.totalorder %s12, 0
      %p96 = por %p94, %p95
      %p97 = scmp.ne.s32.totalorder %s86, %s89
      %p98 = scmp.eq.s32.totalorder %s17, 3
      %p99 = por %p97, %p98
      %p100 = scmp.ne.s32.totalorder %s89, %s90
      %p101 = scmp.eq.s32.totalorder %s17, 0
      %p102 = por %p100, %p101
      %p103 = scmp.ne.s32.totalorder %s89, %s90
      %p104 = scmp.eq.s32.totalorder %s18, 3
      %p105 = por %p103, %p104
      %p107 = scmp.ne.s32.totalorder %s90, %s106
      %p108 = scmp.eq.s32.totalorder %s18, 0
      %p109 = por %p107, %p108
      %s110 = ssub.s32 %s19, %s31
      %s111 = ssub.s32 %s20, %s27
      %s112 = sor.u32 %s110, %s111
      %p113 = scmp.eq.s32.totalorder %s112, 0
      %s115 = sadd.s32 %s114, 1
      %s116 = scalar_select %p113, %s114, %s115
      %p119 = pneg %p113
      %p120 = scmp.eq.s32.totalorder %s12, 3
      %p121 = por %p119, %p120
      %p122 = scmp.ne.s32.totalorder %s114, %s117
      %p123 = scmp.eq.s32.totalorder %s12, 0
      %p124 = por %p122, %p123
      %p125 = scmp.ne.s32.totalorder %s114, %s117
      %p126 = scmp.eq.s32.totalorder %s17, 3
      %p127 = por %p125, %p126
      %p128 = scmp.ne.s32.totalorder %s117, %s118
      %p129 = scmp.eq.s32.totalorder %s17, 0
      %p130 = por %p128, %p129
      %p131 = scmp.ne.s32.totalorder %s117, %s118
      %p132 = scmp.eq.s32.totalorder %s18, 3
      %p133 = por %p131, %p132
      %p135 = scmp.ne.s32.totalorder %s118, %s134
      %p136 = scmp.eq.s32.totalorder %s18, 0
      %p137 = por %p135, %p136
      %p138 = scmp.le.s32.totalorder 1, %s12
      %p139 = scmp.lt.s32.totalorder %s12, 5
      %p140 = pnand %p138, %p139
      %p141 = pneg %p140
      // Predicated region
      $region9: #{tpu_custom_call.1} parent=5 // pred_check
        _
      $region10: #{tpu_custom_call.1} parent=5 // pred_check_branch
        %143 = sbr.rel (%p140) target = $region12
      $region11: #{tpu_custom_call.1} parent=5 // pred_region
        %s144 = ssub.s32 %s12, 1
        // Predicated region
        $region13: #{tpu_custom_call.1} parent=11 // pred_check
          %p145 = pneg %p76
        $region14: #{tpu_custom_call.1} parent=11 // pred_check_branch
          %147 = sbr.rel (%p145) target = $region16
        $region15: #{tpu_custom_call.1} parent=11 // pred_region
          %p148 = scmp.lt.s32.totalorder %s22, 0
          %s149 = scalar_select %p148, %s22, 0
          %s150 = smul.addr %s149, 8
          %s151 = scalar_lea.vmem %s1, %s150
        $region16: #{tpu_custom_call.1} parent=11 // pred_fallthru
          _
        // Predicated region
        $region17: #{tpu_custom_call.1} parent=11 // pred_check
          %p152 = pneg %p102
        $region18: #{tpu_custom_call.1} parent=11 // pred_check_branch
          %154 = sbr.rel (%p152) target = $region20
        $region19: #{tpu_custom_call.1} parent=11 // pred_region
          %p155 = scmp.lt.s32.totalorder %s22, 0
          %s156 = scalar_select %p155, %s22, 0
          %s157 = scalar_lea.vmem %s2, %s156
        $region20: #{tpu_custom_call.1} parent=11 // pred_fallthru
          _
      $region12: #{tpu_custom_call.1} parent=5 // pred_fallthru
        _
      %p158 = scmp.lt.s32.totalorder %s12, 4
      // Predicated region
      $region21: #{tpu_custom_call.1} parent=5 // pred_check
        %p159 = pneg %p158
      $region22: #{tpu_custom_call.1} parent=5 // pred_check_branch
        %161 = sbr.rel (%p159) target = $region24
      $region23: #{tpu_custom_call.1} parent=5 // pred_region
        // Predicated region
        $region25: #{tpu_custom_call.1} parent=23 // pred_check
          %p162 = pneg %p44
        $region26: #{tpu_custom_call.1} parent=23 // pred_check_branch
          %164 = sbr.rel (%p162) target = $region28
        $region27: #{tpu_custom_call.1} parent=23 // pred_region
          %s165 = smul.u32 32, %s19
          %p166 = scmp.lt.s32.totalorder %s165, 127
          %s167 = scalar_select %p166, %s165, 127
          %s168 = smul.addr %s167, 8
          %s169 = scalar_lea.vmem %s0, %s168
          %s170 = smul.u32 32, %s19
        $region28: #{tpu_custom_call.1} parent=23 // pred_fallthru
          _
      $region24: #{tpu_custom_call.1} parent=5 // pred_fallthru
        _
      %p171 = scmp.le.s32.totalorder 1, %s12
      %p172 = scmp.lt.s32.totalorder %s12, 5
      %p173 = pnand %p171, %p172
      %p174 = pneg %p173
      // Predicated region
      $region29: #{tpu_custom_call.1} parent=5 // pred_check
        _
      $region30: #{tpu_custom_call.1} parent=5 // pred_check_branch
        %176 = sbr.rel (%p173) target = $region32
      $region31: #{tpu_custom_call.1} parent=5 // pred_region
        %s177 = ssub.s32 %s12, 1
        %s178 = smul.u32 32, %s21
        %p179 = scmp.lt.s32.totalorder %s178, 127
        %s180 = scalar_select %p179, %s178, 127
        %s181 = smul.addr %s180, 8
        %s182 = scalar_lea.vmem %s0, %s181
        %p183 = pneg %p50
        %p184 = pneg %p47
        %p185 = scmp.lt.s32.totalorder %s22, 0
        %s186 = scalar_select %p185, %s22, 0
        %s187 = smul.addr %s186, 8
        %s188 = scalar_lea.vmem %s1, %s187
        %p189 = pneg %p76
        %p190 = pneg %p73
        %p191 = scmp.lt.s32.totalorder %s22, 0
        %s192 = scalar_select %p191, %s22, 0
        %s193 = scalar_lea.vmem %s2, %s192
        %p194 = pneg %p102
        %p195 = pneg %p99
        %p196 = pneg %p130
        %p197 = pneg %p127
        %s198 = sand.u32 %s117, 1
        %s199 = scalar_lea.sflag [#allocation3], %s198
        %s200 = sand.u32 %s117, 1
        %s201 = smul.addr %s200, 256
        %s202 = scalar_lea.vmem [#allocation2], %s201
        %s203 = smul.u32 32, %s21
        %p204 = scmp.lt.s32.totalorder %s203, 127
        %s205 = scalar_select %p204, %s203, 127
        %s206 = smul.addr %s205, 8
        %s207 = scalar_lea.vmem %s0, %s206
        %s208 = smul.u32 32, %s21
        %p209 = scmp.lt.s32.totalorder %s22, 0
        %s210 = scalar_select %p209, %s22, 0
        %s211 = smul.addr %s210, 8
        %s212 = scalar_lea.vmem %s1, %s211
        %p213 = scmp.lt.s32.totalorder %s22, 0
        %s214 = scalar_select %p213, %s22, 0
        %s215 = scalar_lea.vmem %s2, %s214
        %s216 = smul.u32 32, %s21
        %v217 = vld [vmem:[%s207] sm:$0xff]
        %v218 = vld [vmem:[%s207 + $0x8] sm:$0xff]
        %v219 = vld [vmem:[%s207 + $0x10] sm:$0xff]
        %v220 = vld [vmem:[%s207 + $0x18] sm:$0xff]
        %v221 = vld [vmem:[%s207 + $0x20] sm:$0xff]
        %v222 = vld [vmem:[%s207 + $0x28] sm:$0xff]
        %v223 = vld [vmem:[%s207 + $0x30] sm:$0xff]
        %v224 = vld [vmem:[%s207 + $0x38] sm:$0xff]
        %v225 = vld [vmem:[%s207 + $0x40] sm:$0xff]
        %v226 = vld [vmem:[%s207 + $0x48] sm:$0xff]
        %v227 = vld [vmem:[%s207 + $0x50] sm:$0xff]
        %v228 = vld [vmem:[%s207 + $0x58] sm:$0xff]
        %v229 = vld [vmem:[%s207 + $0x60] sm:$0xff]
        %v230 = vld [vmem:[%s207 + $0x68] sm:$0xff]
        %v231 = vld [vmem:[%s207 + $0x70] sm:$0xff]
        %v232 = vld [vmem:[%s207 + $0x78] sm:$0xff]
        %v233 = vld [vmem:[%s207 + $0x80] sm:$0xff]
        %v234 = vld [vmem:[%s207 + $0x88] sm:$0xff]
        %v235 = vld [vmem:[%s207 + $0x90] sm:$0xff]
        %v236 = vld [vmem:[%s207 + $0x98] sm:$0xff]
        %v237 = vld [vmem:[%s207 + $0xa0] sm:$0xff]
        %v238 = vld [vmem:[%s207 + $0xa8] sm:$0xff]
        %v239 = vld [vmem:[%s207 + $0xb0] sm:$0xff]
        %v240 = vld [vmem:[%s207 + $0xb8] sm:$0xff]
        %v241 = vld [vmem:[%s207 + $0xc0] sm:$0xff]
        %v242 = vld [vmem:[%s207 + $0xc8] sm:$0xff]
        %v243 = vld [vmem:[%s207 + $0xd0] sm:$0xff]
        %v244 = vld [vmem:[%s207 + $0xd8] sm:$0xff]
        %v245 = vld [vmem:[%s207 + $0xe0] sm:$0xff]
        %v246 = vld [vmem:[%s207 + $0xe8] sm:$0xff]
        %v247 = vld [vmem:[%s207 + $0xf0] sm:$0xff]
        %v248 = vld [vmem:[%s207 + $0xf8] sm:$0xff]
        %v249 = vld [vmem:[%s212] sm:$0xff]
        %v250 = vld [vmem:[%s212 + $0x8] sm:$0xff]
        %v251 = vld [vmem:[%s212 + $0x10] sm:$0xff]
        %v252 = vld [vmem:[%s212 + $0x18] sm:$0x7]
        %v253 = vld [vmem:[%s215] sm:$0x1]
        %v255 = vlaneseq
        %v256 = vshrl.u32 %v255, 7
        %v257 = vsub.s32 0, %v256
        %v258 = vrot.slane %v253, %v257
        %vm260 = vcmask 220160
        %v262 = vsel %vm260, %v217, 0
        %v265 = vsel %vm260, %v218, 0
        %v268 = vsel %vm260, %v219, 0
        %v271 = vsel %vm260, %v220, 0
        %v274 = vsel %vm260, %v221, 0
        %v277 = vsel %vm260, %v222, 0
        %v280 = vsel %vm260, %v223, 0
        %v283 = vsel %vm260, %v224, 0
        %v286 = vsel %vm260, %v225, 0
        %v289 = vsel %vm260, %v226, 0
        %v292 = vsel %vm260, %v227, 0
        %v295 = vsel %vm260, %v228, 0
        %v298 = vsel %vm260, %v229, 0
        %v301 = vsel %vm260, %v230, 0
        %v304 = vsel %vm260, %v231, 0
        %v307 = vsel %vm260, %v232, 0
        %v310 = vsel %vm260, %v233, 0
        %v313 = vsel %vm260, %v234, 0
        %v316 = vsel %vm260, %v235, 0
        %v319 = vsel %vm260, %v236, 0
        %v322 = vsel %vm260, %v237, 0
        %v325 = vsel %vm260, %v238, 0
        %v328 = vsel %vm260, %v239, 0
        %v331 = vsel %vm260, %v240, 0
        %v334 = vsel %vm260, %v241, 0
        %v337 = vsel %vm260, %v242, 0
        %v340 = vsel %vm260, %v243, 0
        %v343 = vsel %vm260, %v244, 0
        %v346 = vsel %vm260, %v245, 0
        %v349 = vsel %vm260, %v246, 0
        %v352 = vsel %vm260, %v247, 0
        %v355 = vsel %vm260, %v248, 0
        %vm357 = vcmask 1042432
        %v359 = vsel %vm357, %v252, 0
        %361 = vmatprep.subr.mxu0 0.0
        %362 = vmatpush1.msra.mxu0 %v249
        %363 = vmatprep.subr.mxu0 0.0
        %364 = vmatpush1.msra.mxu0 %v250
        %365 = vmatprep.subr.mxu0 0.0
        %366 = vmatpush1.msra.mxu0 %v251
        %367 = vmatprep.subr.mxu0 0.0
        %368 = vmatpush1.msra.mxu0 %v359
        %369 = vmatprep.subr.mxu0 0.0
        %370 = vmatpush1.msra.mxu0 0.0
        %371 = vmatprep.subr.mxu0 0.0
        %372 = vmatpush1.msra.mxu0 0.0
        %373 = vmatprep.subr.mxu0 0.0
        %374 = vmatpush1.msra.mxu0 0.0
        %375 = vmatprep.subr.mxu0 0.0
        %376 = vmatpush1.msra.mxu0 0.0
        %377 = vmatprep.subr.mxu0 0.0
        %378 = vmatpush1.msra.mxu0 0.0
        %379 = vmatprep.subr.mxu0 0.0
        %380 = vmatpush1.msra.mxu0 0.0
        %381 = vmatprep.subr.mxu0 0.0
        %382 = vmatpush1.msra.mxu0 0.0
        %383 = vmatprep.subr.mxu0 0.0
        %384 = vmatpush1.msra.mxu0 0.0
        %385 = vmatprep.subr.mxu0 0.0
        %386 = vmatpush1.msra.mxu0 0.0
        %387 = vmatprep.subr.mxu0 0.0
        %388 = vmatpush1.msra.mxu0 0.0
        %389 = vmatprep.subr.mxu0 0.0
        %390 = vmatpush1.msra.mxu0 0.0
        %391 = vmatprep.subr.mxu0 0.0
        %392 = vmatpush1.msra.mxu0 0.0
        %393 = vmatprep.subr.mxu0 0.0
        %394 = vmatpush1.msra.mxu0 0.0
        %395 = vmatprep.subr.mxu0 0.0
        %396 = vmatpush1.msra.mxu0 0.0
        %397 = vmatprep.subr.mxu0 0.0
        %398 = vmatpush1.msra.mxu0 0.0
        %399 = vmatprep.subr.mxu0 0.0
        %400 = vmatpush1.msra.mxu0 0.0
        %401 = vmatprep.subr.mxu0 0.0
        %402 = vmatpush1.msra.mxu0 0.0
        %403 = vmatprep.subr.mxu0 0.0
        %404 = vmatpush1.msra.mxu0 0.0
        %405 = vmatprep.subr.mxu0 0.0
        %406 = vmatpush1.msra.mxu0 0.0
        %407 = vmatprep.subr.mxu0 0.0
        %408 = vmatpush1.msra.mxu0 0.0
        %409 = vmatprep.subr.mxu0 0.0
        %410 = vmatpush1.msra.mxu0 0.0
        %411 = vmatprep.subr.mxu0 0.0
        %412 = vmatpush1.msra.mxu0 0.0
        %413 = vmatprep.subr.mxu0 0.0
        %414 = vmatpush1.msra.mxu0 0.0
        %415 = vmatprep.subr.mxu0 0.0
        %416 = vmatpush1.msra.mxu0 0.0
        %417 = vmatprep.subr.mxu0 0.0
        %418 = vmatpush1.msra.mxu0 0.0
        %419 = vmatprep.subr.mxu0 0.0
        %420 = vmatpush1.msra.mxu0 0.0
        %421 = vmatprep.subr.mxu0 0.0
        %422 = vmatpush1.msra.mxu0 0.0
        %423 = vmatprep.subr.mxu0 0.0
        %424 = vmatpush1.msra.mxu0 0.0
        %425 = vmatprep.mubr.f32.mxu0 0.0
        %426 = vmatmul.mubr.f32.gmra.mrb[0].mxu0 %v262
        %v427 = vpop.f32.mrb[0].mxu0
        %v428 = vadd.f32 %v258, %v427
        %v429 = vpop.f32.mrb[0].mxu0
        %430 = vmatprep.mubr.f32.mxu0 0.0
        %431 = vmatmul.mubr.f32.gmra.mrb[0].mxu0 %v265
        %v432 = vpop.f32.mrb[0].mxu0
        %v433 = vadd.f32 %v258, %v432
        %v434 = vpop.f32.mrb[0].mxu0
        %435 = vmatprep.mubr.f32.mxu0 0.0
        %436 = vmatmul.mubr.f32.gmra.mrb[0].mxu0 %v268
        %v437 = vpop.f32.mrb[0].mxu0
        %v438 = vadd.f32 %v258, %v437
        %v439 = vpop.f32.mrb[0].mxu0
        %440 = vmatprep.mubr.f32.mxu0 0.0
        %441 = vmatmul.mubr.f32.gmra.mrb[0].mxu0 %v271
        %v442 = vpop.f32.mrb[0].mxu0
        %v443 = vadd.f32 %v258, %v442
        %v444 = vpop.f32.mrb[0].mxu0
        %445 = vmatprep.mubr.f32.mxu0 0.0
        %446 = vmatmul.mubr.f32.gmra.mrb[0].mxu0 %v274
        %v447 = vpop.f32.mrb[0].mxu0
        %v448 = vadd.f32 %v258, %v447
        %v449 = vpop.f32.mrb[0].mxu0
        %450 = vmatprep.mubr.f32.mxu0 0.0
        %451 = vmatmul.mubr.f32.gmra.mrb[0].mxu0 %v277
        %v452 = vpop.f32.mrb[0].mxu0
        %v453 = vadd.f32 %v258, %v452
        %v454 = vpop.f32.mrb[0].mxu0
        %455 = vmatprep.mubr.f32.mxu0 0.0
        %456 = vmatmul.mubr.f32.gmra.mrb[0].mxu0 %v280
        %v457 = vpop.f32.mrb[0].mxu0
        %v458 = vadd.f32 %v258, %v457
        %v459 = vpop.f32.mrb[0].mxu0
        %460 = vmatprep.mubr.f32.mxu0 0.0
        %461 = vmatmul.mubr.f32.gmra.mrb[0].mxu0 %v283
        %v462 = vpop.f32.mrb[0].mxu0
        %v463 = vadd.f32 %v258, %v462
        %v464 = vpop.f32.mrb[0].mxu0
        %465 = vmatprep.mubr.f32.mxu0 0.0
        %466 = vmatmul.mubr.f32.gmra.mrb[0].mxu0 %v286
        %v467 = vpop.f32.mrb[0].mxu0
        %v468 = vadd.f32 %v258, %v467
        %v469 = vpop.f32.mrb[0].mxu0
        %470 = vmatprep.mubr.f32.mxu0 0.0
        %471 = vmatmul.mubr.f32.gmra.mrb[0].mxu0 %v289
        %v472 = vpop.f32.mrb[0].mxu0
        %v473 = vadd.f32 %v258, %v472
        %v474 = vpop.f32.mrb[0].mxu0
        %475 = vmatprep.mubr.f32.mxu0 0.0
        %476 = vmatmul.mubr.f32.gmra.mrb[0].mxu0 %v292
        %v477 = vpop.f32.mrb[0].mxu0
        %v478 = vadd.f32 %v258, %v477
        %v479 = vpop.f32.mrb[0].mxu0
        %480 = vmatprep.mubr.f32.mxu0 0.0
        %481 = vmatmul.mubr.f32.gmra.mrb[0].mxu0 %v295
        %v482 = vpop.f32.mrb[0].mxu0
        %v483 = vadd.f32 %v258, %v482
        %v484 = vpop.f32.mrb[0].mxu0
        %485 = vmatprep.mubr.f32.mxu0 0.0
        %486 = vmatmul.mubr.f32.gmra.mrb[0].mxu0 %v298
        %v487 = vpop.f32.mrb[0].mxu0
        %v488 = vadd.f32 %v258, %v487
        %v489 = vpop.f32.mrb[0].mxu0
        %490 = vmatprep.mubr.f32.mxu0 0.0
        %491 = vmatmul.mubr.f32.gmra.mrb[0].mxu0 %v301
        %v492 = vpop.f32.mrb[0].mxu0
        %v493 = vadd.f32 %v258, %v492
        %v494 = vpop.f32.mrb[0].mxu0
        %495 = vmatprep.mubr.f32.mxu0 0.0
        %496 = vmatmul.mubr.f32.gmra.mrb[0].mxu0 %v304
        %v497 = vpop.f32.mrb[0].mxu0
        %v498 = vadd.f32 %v258, %v497
        %v499 = vpop.f32.mrb[0].mxu0
        %500 = vmatprep.mubr.f32.mxu0 0.0
        %501 = vmatmul.mubr.f32.gmra.mrb[0].mxu0 %v307
        %v502 = vpop.f32.mrb[0].mxu0
        %v503 = vadd.f32 %v258, %v502
        %v504 = vpop.f32.mrb[0].mxu0
        %505 = vmatprep.mubr.f32.mxu0 0.0
        %506 = vmatmul.mubr.f32.gmra.mrb[0].mxu0 %v310
        %v507 = vpop.f32.mrb[0].mxu0
        %v508 = vadd.f32 %v258, %v507
        %v509 = vpop.f32.mrb[0].mxu0
        %510 = vmatprep.mubr.f32.mxu0 0.0
        %511 = vmatmul.mubr.f32.gmra.mrb[0].mxu0 %v313
        %v512 = vpop.f32.mrb[0].mxu0
        %v513 = vadd.f32 %v258, %v512
        %v514 = vpop.f32.mrb[0].mxu0
        %515 = vmatprep.mubr.f32.mxu0 0.0
        %516 = vmatmul.mubr.f32.gmra.mrb[0].mxu0 %v316
        %v517 = vpop.f32.mrb[0].mxu0
        %v518 = vadd.f32 %v258, %v517
        %v519 = vpop.f32.mrb[0].mxu0
        %520 = vmatprep.mubr.f32.mxu0 0.0
        %521 = vmatmul.mubr.f32.gmra.mrb[0].mxu0 %v319
        %v522 = vpop.f32.mrb[0].mxu0
        %v523 = vadd.f32 %v258, %v522
        %v524 = vpop.f32.mrb[0].mxu0
        %525 = vmatprep.mubr.f32.mxu0 0.0
        %526 = vmatmul.mubr.f32.gmra.mrb[0].mxu0 %v322
        %v527 = vpop.f32.mrb[0].mxu0
        %v528 = vadd.f32 %v258, %v527
        %v529 = vpop.f32.mrb[0].mxu0
        %530 = vmatprep.mubr.f32.mxu0 0.0
        %531 = vmatmul.mubr.f32.gmra.mrb[0].mxu0 %v325
        %v532 = vpop.f32.mrb[0].mxu0
        %v533 = vadd.f32 %v258, %v532
        %v534 = vpop.f32.mrb[0].mxu0
        %535 = vmatprep.mubr.f32.mxu0 0.0
        %536 = vmatmul.mubr.f32.gmra.mrb[0].mxu0 %v328
        %v537 = vpop.f32.mrb[0].mxu0
        %v538 = vadd.f32 %v258, %v537
        %v539 = vpop.f32.mrb[0].mxu0
        %540 = vmatprep.mubr.f32.mxu0 0.0
        %541 = vmatmul.mubr.f32.gmra.mrb[0].mxu0 %v331
        %v542 = vpop.f32.mrb[0].mxu0
        %v543 = vadd.f32 %v258, %v542
        %v544 = vpop.f32.mrb[0].mxu0
        %545 = vmatprep.mubr.f32.mxu0 0.0
        %546 = vmatmul.mubr.f32.gmra.mrb[0].mxu0 %v334
        %v547 = vpop.f32.mrb[0].mxu0
        %v548 = vadd.f32 %v258, %v547
        %v549 = vpop.f32.mrb[0].mxu0
        %550 = vmatprep.mubr.f32.mxu0 0.0
        %551 = vmatmul.mubr.f32.gmra.mrb[0].mxu0 %v337
        %v552 = vpop.f32.mrb[0].mxu0
        %v553 = vadd.f32 %v258, %v552
        %v554 = vpop.f32.mrb[0].mxu0
        %555 = vmatprep.mubr.f32.mxu0 0.0
        %556 = vmatmul.mubr.f32.gmra.mrb[0].mxu0 %v340
        %v557 = vpop.f32.mrb[0].mxu0
        %v558 = vadd.f32 %v258, %v557
        %v559 = vpop.f32.mrb[0].mxu0
        %560 = vmatprep.mubr.f32.mxu0 0.0
        %561 = vmatmul.mubr.f32.gmra.mrb[0].mxu0 %v343
        %v562 = vpop.f32.mrb[0].mxu0
        %v563 = vadd.f32 %v258, %v562
        %v564 = vpop.f32.mrb[0].mxu0
        %565 = vmatprep.mubr.f32.mxu0 0.0
        %566 = vmatmul.mubr.f32.gmra.mrb[0].mxu0 %v346
        %v567 = vpop.f32.mrb[0].mxu0
        %v568 = vadd.f32 %v258, %v567
        %v569 = vpop.f32.mrb[0].mxu0
        %570 = vmatprep.mubr.f32.mxu0 0.0
        %571 = vmatmul.mubr.f32.gmra.mrb[0].mxu0 %v349
        %v572 = vpop.f32.mrb[0].mxu0
        %v573 = vadd.f32 %v258, %v572
        %v574 = vpop.f32.mrb[0].mxu0
        %575 = vmatprep.mubr.f32.mxu0 0.0
        %576 = vmatmul.mubr.f32.gmra.mrb[0].mxu0 %v352
        %v577 = vpop.f32.mrb[0].mxu0
        %v578 = vadd.f32 %v258, %v577
        %v579 = vpop.f32.mrb[0].mxu0
        %580 = vmatprep.mubr.f32.mxu0 0.0
        %581 = vmatmul.mubr.f32.gmra.mrb[0].mxu0 %v355
        %v582 = vpop.f32.mrb[0].mxu0
        %v583 = vadd.f32 %v258, %v582
        %v584 = vpop.f32.mrb[0].mxu0
        %585 = vdwg.mxu0
        %v586 = vmax.f32 %v428, 0.0
        %v587 = vmax.f32 %v433, 0.0
        %v588 = vmax.f32 %v438, 0.0
        %v589 = vmax.f32 %v443, 0.0
        %v590 = vmax.f32 %v448, 0.0
        %v591 = vmax.f32 %v453, 0.0
        %v592 = vmax.f32 %v458, 0.0
        %v593 = vmax.f32 %v463, 0.0
        %v594 = vmax.f32 %v468, 0.0
        %v595 = vmax.f32 %v473, 0.0
        %v596 = vmax.f32 %v478, 0.0
        %v597 = vmax.f32 %v483, 0.0
        %v598 = vmax.f32 %v488, 0.0
        %v599 = vmax.f32 %v493, 0.0
        %v600 = vmax.f32 %v498, 0.0
        %v601 = vmax.f32 %v503, 0.0
        %v602 = vmax.f32 %v508, 0.0
        %v603 = vmax.f32 %v513, 0.0
        %v604 = vmax.f32 %v518, 0.0
        %v605 = vmax.f32 %v523, 0.0
        %v606 = vmax.f32 %v528, 0.0
        %v607 = vmax.f32 %v533, 0.0
        %v608 = vmax.f32 %v538, 0.0
        %v609 = vmax.f32 %v543, 0.0
        %v610 = vmax.f32 %v548, 0.0
        %v611 = vmax.f32 %v553, 0.0
        %v612 = vmax.f32 %v558, 0.0
        %v613 = vmax.f32 %v563, 0.0
        %v614 = vmax.f32 %v568, 0.0
        %v615 = vmax.f32 %v573, 0.0
        %v616 = vmax.f32 %v578, 0.0
        %v617 = vmax.f32 %v583, 0.0
        %618 = vst [vmem:[%s202] sm:$0xff] %v586
        %619 = vst [vmem:[%s202 + $0x8] sm:$0xff] %v587
        %620 = vst [vmem:[%s202 + $0x10] sm:$0xff] %v588
        %621 = vst [vmem:[%s202 + $0x18] sm:$0xff] %v589
        %622 = vst [vmem:[%s202 + $0x20] sm:$0xff] %v590
        %623 = vst [vmem:[%s202 + $0x28] sm:$0xff] %v591
        %624 = vst [vmem:[%s202 + $0x30] sm:$0xff] %v592
        %625 = vst [vmem:[%s202 + $0x38] sm:$0xff] %v593
        %626 = vst [vmem:[%s202 + $0x40] sm:$0xff] %v594
        %627 = vst [vmem:[%s202 + $0x48] sm:$0xff] %v595
        %628 = vst [vmem:[%s202 + $0x50] sm:$0xff] %v596
        %629 = vst [vmem:[%s202 + $0x58] sm:$0xff] %v597
        %630 = vst [vmem:[%s202 + $0x60] sm:$0xff] %v598
        %631 = vst [vmem:[%s202 + $0x68] sm:$0xff] %v599
        %632 = vst [vmem:[%s202 + $0x70] sm:$0xff] %v600
        %633 = vst [vmem:[%s202 + $0x78] sm:$0xff] %v601
        %634 = vst [vmem:[%s202 + $0x80] sm:$0xff] %v602
        %635 = vst [vmem:[%s202 + $0x88] sm:$0xff] %v603
        %636 = vst [vmem:[%s202 + $0x90] sm:$0xff] %v604
        %637 = vst [vmem:[%s202 + $0x98] sm:$0xff] %v605
        %638 = vst [vmem:[%s202 + $0xa0] sm:$0xff] %v606
        %639 = vst [vmem:[%s202 + $0xa8] sm:$0xff] %v607
        %640 = vst [vmem:[%s202 + $0xb0] sm:$0xff] %v608
        %641 = vst [vmem:[%s202 + $0xb8] sm:$0xff] %v609
        %642 = vst [vmem:[%s202 + $0xc0] sm:$0xff] %v610
        %643 = vst [vmem:[%s202 + $0xc8] sm:$0xff] %v611
        %644 = vst [vmem:[%s202 + $0xd0] sm:$0xff] %v612
        %645 = vst [vmem:[%s202 + $0xd8] sm:$0xff] %v613
        %646 = vst [vmem:[%s202 + $0xe0] sm:$0xff] %v614
        %647 = vst [vmem:[%s202 + $0xe8] sm:$0xff] %v615
        %648 = vst [vmem:[%s202 + $0xf0] sm:$0xff] %v616
        %649 = vst [vmem:[%s202 + $0xf8] sm:$0xff] %v617
        %s650 = sand.u32 %s117, 1
        %s651 = scalar_lea.sflag [#allocation3], %s650
        %s652 = sand.u32 %s117, 1
        %s653 = smul.addr %s652, 256
        %s654 = scalar_lea.vmem [#allocation2], %s653
        // Predicated region
        $region33: #{tpu_custom_call.1} parent=31 // pred_check
          %p655 = pneg %p127
        $region34: #{tpu_custom_call.1} parent=31 // pred_check_branch
          %657 = sbr.rel (%p655) target = $region36
        $region35: #{tpu_custom_call.1} parent=31 // pred_region
          %s658 = smul.u32 32, %s21
          %s660 = ssub.s32 4096, 4096
          %661 = vsyncadd %s651, %s660
          %s662 = sadd.s32 %s22, %s658
          %s663 = smul.addr %s662, 128
          %s664 = scalar_lea.hbm %s3, %s663
          %s665 = sshll.u32 %s654, 4
          %s666 = int_to_ptr.vmem [resolvable:$true] %s665
          %671 = dma.vmem_to_hbm [thread:$0]  %s666, 4096, %s664, %s651, 128, 128, 8
        $region36: #{tpu_custom_call.1} parent=31 // pred_fallthru
          _
      $region32: #{tpu_custom_call.1} parent=5 // pred_fallthru
        _
      %p672 = scmp.le.s32.totalorder 2, %s12
      // Predicated region
      $region37: #{tpu_custom_call.1} parent=5 // pred_check
        %p673 = pneg %p672
      $region38: #{tpu_custom_call.1} parent=5 // pred_check_branch
        %675 = sbr.rel (%p673) target = $region40
      $region39: #{tpu_custom_call.1} parent=5 // pred_region
        %s676 = ssub.s32 %s12, 2
        // Predicated region
        $region41: #{tpu_custom_call.1} parent=39 // pred_check
          %p677 = pneg %p133
        $region42: #{tpu_custom_call.1} parent=39 // pred_check_branch
          %679 = sbr.rel (%p677) target = $region44
        $region43: #{tpu_custom_call.1} parent=39 // pred_region
          %s680 = sand.u32 %s118, 1
          %s681 = scalar_lea.sflag [#allocation3], %s680
          %s682 = sand.u32 %s118, 1
          %s683 = smul.addr %s682, 256
          %s684 = scalar_lea.vmem [#allocation2], %s683
          %685 = dma.done %s681, 4096
        $region44: #{tpu_custom_call.1} parent=39 // pred_fallthru
          _
      $region40: #{tpu_custom_call.1} parent=5 // pred_fallthru
        _
    $region6: #{tpu_custom_call.1} parent=1 // loop_footer
      %s16 = sadd.s32 1, %s12
    $region7: #{tpu_custom_call.1} parent=1 // loop_footer_branch
      %11 = sbr.rel target = $region3
    $region8: #{tpu_custom_call.1} parent=1 // loop_exit
      _
    %686 = vsyncpa [#allocation3], 1
    %s687 = scalar_lea.sflag [#allocation3], 1
    %688 = vsyncpa %s687, 1

</llo_original>
